<compile_context>
chip_gen: v6e
topology: v6e:2x2x1
jax: 0.10.0
libtpu: 0.0.40
codegen_flags: <defaults>
</compile_context>

<pallas_src>
import jax
import jax.numpy as jnp
from jax.experimental import pallas as pl
from jax.experimental.pallas import tpu as pltpu


def _round_up(x, m):
    return ((x + m - 1) // m) * m


def _quant_linear_kernel(x_ref, w_ref, b_ref, o_ref, acc_ref):
    """One (tm, tn) output tile, accumulating over the K grid axis.

    x_ref  : (tm, tk)  input tile
    w_ref  : (tk, tn)  pre-transposed weight tile ([in, out] layout -> MXU native)
    b_ref  : (1,  tn)  bias tile (f32)
    o_ref  : (tm, tn)  output tile
    acc_ref: (tm, tn)  f32 accumulator scratch (resident across the K axis)
    """
    k = pl.program_id(2)

    @pl.when(k == 0)
    def _():
        acc_ref[...] = jnp.zeros_like(acc_ref)

    acc_ref[...] += jnp.dot(
        x_ref[...], w_ref[...], preferred_element_type=jnp.float32
    )

    @pl.when(k == pl.num_programs(2) - 1)
    def _():
        o_ref[...] = (acc_ref[...] + b_ref[...]).astype(o_ref.dtype)


def quant_linear(x, weight, bias=None, *, tm=256, tn=512, tk=512, mxu_dtype=None):
    """Pallas equivalent of QuantLinear.forward in the default quant state.

    x:      [..., in_features]
    weight: [out_features, in_features]   (PyTorch nn.Linear layout)
    bias:   [out_features] or None
    mxu_dtype: optional compute dtype for the MXU operands (e.g. jnp.bfloat16);
               accumulation stays f32, output keeps weight.dtype.
    returns [..., out_features]
    """
    out_features, in_features = weight.shape
    assert x.shape[-1] == in_features

    lead_shape = x.shape[:-1]
    out_dtype = weight.dtype
    compute_dtype = out_dtype if mxu_dtype is None else mxu_dtype

    # Matches PyTorch: input.to(weight.dtype)
    x2d = x.reshape(-1, in_features).astype(compute_dtype)
    wT = weight.T.astype(compute_dtype)  # [K, N], one-time transpose in the wrapper
    M, K = x2d.shape
    N = out_features

    # Clamp tiles to the (hardware-rounded) problem size, keep (8, 128) granularity.
    tm = min(tm, _round_up(M, 8))
    tn = min(tn, _round_up(N, 128))
    tk = min(tk, _round_up(K, 128))

    # Pad every dim to a multiple of its tile (zero-padded K contributes 0 to the dot).
    Mp, Kp, Np = _round_up(M, tm), _round_up(K, tk), _round_up(N, tn)
    if (Mp, Kp) != (M, K):
        x2d = jnp.pad(x2d, ((0, Mp - M), (0, Kp - K)))
    if (Kp, Np) != (K, N):
        wT = jnp.pad(wT, ((0, Kp - K), (0, Np - N)))

    if bias is None:
        bias_f32 = jnp.zeros((Np,), dtype=jnp.float32)
    else:
        bias_f32 = bias.astype(jnp.float32)
        if Np != N:
            bias_f32 = jnp.pad(bias_f32, (0, Np - N))
    bias2d = bias_f32.reshape(1, Np)

    grid = (Mp // tm, Np // tn, Kp // tk)

    in_itemsize = jnp.dtype(compute_dtype).itemsize
    out_itemsize = jnp.dtype(out_dtype).itemsize

    # Double-buffered input/output tiles + f32 accumulator, with 2x headroom,
    # capped well under v7x's 64 MiB physical VMEM.
    vmem_need = (
        2 * (tm * tk * in_itemsize + tk * tn * in_itemsize + tn * 4)
        + 2 * tm * tn * out_itemsize
        + tm * tn * 4
    )
    vmem_limit = int(min(max(2 * vmem_need, 32 * 1024 * 1024), 60 * 1024 * 1024))

    cost = pl.CostEstimate(
        flops=2 * Mp * Np * Kp,
        transcendentals=0,
        bytes_accessed=(
            Mp * Kp * in_itemsize
            + Kp * Np * in_itemsize
            + Np * 4
            + Mp * Np * out_itemsize
        ),
    )

    out2d = pl.pallas_call(
        _quant_linear_kernel,
        out_shape=jax.ShapeDtypeStruct((Mp, Np), out_dtype),
        grid_spec=pltpu.PrefetchScalarGridSpec(
            num_scalar_prefetch=0,
            grid=grid,
            in_specs=[
                pl.BlockSpec((tm, tk), lambda i, j, k: (i, k)),  # x tile
                pl.BlockSpec((tk, tn), lambda i, j, k: (k, j)),  # W^T tile ([in, out])
                pl.BlockSpec((1, tn), lambda i, j, k: (0, j)),   # bias tile (f32)
            ],
            out_specs=pl.BlockSpec((tm, tn), lambda i, j, k: (i, j)),
            scratch_shapes=[pltpu.VMEM((tm, tn), jnp.float32)],
        ),
        compiler_params=pltpu.CompilerParams(
            dimension_semantics=("parallel", "parallel", "arbitrary"),
            vmem_limit_bytes=vmem_limit,
        ),
        cost_estimate=cost,
    )(x2d, wT, bias2d)

    return out2d[:M, :N].reshape(*lead_shape, N)


if __name__ == "__main__":
    key = jax.random.PRNGKey(0)
    kx, kw, kb, kx2, kw2, kb2 = jax.random.split(key, 6)

    # --- Case 1: tile-friendly shapes (batch=2, seq=8, hidden=256) ---
    batch, seq = 2, 8
    in_features, out_features = 256, 256

    x = jax.random.normal(kx, (batch, seq, in_features), dtype=jnp.float32)
    weight = jax.random.normal(kw, (out_features, in_features), dtype=jnp.float32) * 0.02
    bias = jax.random.normal(kb, (out_features,), dtype=jnp.float32) * 0.01

    out = jax.block_until_ready(quant_linear(x, weight, bias))
    ref = jnp.einsum("bsi,oi->bso", x, weight) + bias
    assert out.shape == (batch, seq, out_features)
    assert jnp.allclose(out, ref, atol=1e-4, rtol=1e-4)

    # --- Case 2: ragged shapes to exercise the pad/mask path (and no-bias path) ---
    x2 = jax.random.normal(kx2, (3, 5, 200), dtype=jnp.float32)
    weight2 = jax.random.normal(kw2, (136, 200), dtype=jnp.float32) * 0.02
    bias2 = jax.random.normal(kb2, (136,), dtype=jnp.float32) * 0.01

    out2 = jax.block_until_ready(quant_linear(x2, weight2, bias2))
    ref2 = jnp.einsum("bsi,oi->bso", x2, weight2) + bias2
    assert out2.shape == (3, 5, 136)
    assert jnp.allclose(out2, ref2, atol=1e-4, rtol=1e-4)

    out3 = jax.block_until_ready(quant_linear(x2, weight2, None))
    ref3 = jnp.einsum("bsi,oi->bso", x2, weight2)
    assert jnp.allclose(out3, ref3, atol=1e-4, rtol=1e-4)

    print("KERNEL_OK")
</pallas_src>

<mosaic_0001>
module attributes {stable_mosaic.version = 11 : i64} {
  func.func @_quant_linear_kernel(%arg0: i32, %arg1: i32, %arg2: i32, %arg3: memref<16x256xf32, #tpu.memory_space<vmem>>, %arg4: memref<256x256xf32, #tpu.memory_space<vmem>>, %arg5: memref<1x256xf32, #tpu.memory_space<vmem>>, %arg6: memref<16x256xf32, #tpu.memory_space<vmem>>, %arg7: memref<16x256xf32, #tpu.memory_space<vmem>>) attributes {dimension_semantics = [#tpu.dimension_semantics<parallel>, #tpu.dimension_semantics<parallel>, #tpu.dimension_semantics<arbitrary>], iteration_bounds = array<i64: 1, 1, 1>, scalar_prefetch = 0 : i64, scratch_operands = 1 : i64, tpu.core_type = #tpu.core_type<tc>, window_params = [{transform_indices = @transform_0, window_bounds = array<i64: 16, 256>}, {transform_indices = @transform_1, window_bounds = array<i64: 256, 256>}, {transform_indices = @transform_2, window_bounds = array<i64: 1, 256>}, {transform_indices = @transform_3, window_bounds = array<i64: 16, 256>}]} {
    %c0_i32 = arith.constant 0 : i32
    %0 = arith.cmpi eq, %arg2, %c0_i32 : i32
    %1 = arith.extui %0 : i1 to i32
    %c0_i32_0 = arith.constant 0 : i32
    %2 = arith.cmpi ne, %1, %c0_i32_0 : i32
    scf.if %2 {
      %cst_10 = arith.constant 0.000000e+00 : f32
      %12 = vector.broadcast %cst_10 : f32 to vector<16x256xf32>
      %c0_11 = arith.constant 0 : index
      %c0_12 = arith.constant 0 : index
      %13 = vector.load %arg7[%c0_11, %c0_12] : memref<16x256xf32, #tpu.memory_space<vmem>>, vector<16x256xf32>
      tpu.vector_store %arg7[%c0_11, %c0_12], %12 {strides = array<i32>} : memref<16x256xf32, #tpu.memory_space<vmem>>, vector<16x256xf32>,
    } else {
    }
    %c0 = arith.constant 0 : index
    %c0_1 = arith.constant 0 : index
    %3 = vector.load %arg7[%c0, %c0_1] : memref<16x256xf32, #tpu.memory_space<vmem>>, vector<16x256xf32>
    %c0_2 = arith.constant 0 : index
    %c0_3 = arith.constant 0 : index
    %4 = vector.load %arg3[%c0_2, %c0_3] : memref<16x256xf32, #tpu.memory_space<vmem>>, vector<16x256xf32>
    %c0_4 = arith.constant 0 : index
    %c0_5 = arith.constant 0 : index
    %5 = vector.load %arg4[%c0_4, %c0_5] : memref<256x256xf32, #tpu.memory_space<vmem>>, vector<256x256xf32>
    %cst = arith.constant dense<0.000000e+00> : vector<16x256xf32>
    %6 = tpu.matmul %4, %5, %cst {dimension_numbers = #tpu.dot_dimension_numbers<[1], [0], [0], [1], [0, 0, 1, 1], [], []>} : vector<16x256xf32>, vector<256x256xf32>, vector<16x256xf32> -> vector<16x256xf32>
    %7 = arith.addf %3, %6 : vector<16x256xf32>
    %c0_6 = arith.constant 0 : index
    %c0_7 = arith.constant 0 : index
    %8 = vector.load %arg7[%c0_6, %c0_7] : memref<16x256xf32, #tpu.memory_space<vmem>>, vector<16x256xf32>
    tpu.vector_store %arg7[%c0_6, %c0_7], %7 {strides = array<i32>} : memref<16x256xf32, #tpu.memory_space<vmem>>, vector<16x256xf32>,
    %c0_i32_8 = arith.constant 0 : i32
    %9 = arith.cmpi eq, %arg2, %c0_i32_8 : i32
    %10 = arith.extui %9 : i1 to i32
    %c0_i32_9 = arith.constant 0 : i32
    %11 = arith.cmpi ne, %10, %c0_i32_9 : i32
    scf.if %11 {
      %c0_10 = arith.constant 0 : index
      %c0_11 = arith.constant 0 : index
      %12 = vector.load %arg7[%c0_10, %c0_11] : memref<16x256xf32, #tpu.memory_space<vmem>>, vector<16x256xf32>
      %c0_12 = arith.constant 0 : index
      %c0_13 = arith.constant 0 : index
      %13 = vector.load %arg5[%c0_12, %c0_13] : memref<1x256xf32, #tpu.memory_space<vmem>>, vector<1x256xf32>
      %14 = vector.broadcast %13 : vector<1x256xf32> to vector<16x256xf32>
      %15 = arith.addf %12, %14 : vector<16x256xf32>
      %c0_14 = arith.constant 0 : index
      %c0_15 = arith.constant 0 : index
      %16 = vector.load %arg6[%c0_14, %c0_15] : memref<16x256xf32, #tpu.memory_space<vmem>>, vector<16x256xf32>
      tpu.vector_store %arg6[%c0_14, %c0_15], %15 {strides = array<i32>} : memref<16x256xf32, #tpu.memory_space<vmem>>, vector<16x256xf32>,
    } else {
    }
    return
  }
  func.func @transform_0(%arg0: i32, %arg1: i32, %arg2: i32) -> (i32, i32) {
    %c0_i32 = arith.constant 0 : i32
    return %arg0, %arg2 : i32, i32
  }
  func.func @transform_1(%arg0: i32, %arg1: i32, %arg2: i32) -> (i32, i32) {
    %c0_i32 = arith.constant 0 : i32
    return %arg2, %arg1 : i32, i32
  }
  func.func @transform_2(%arg0: i32, %arg1: i32, %arg2: i32) -> (i32, i32) {
    %c0_i32 = arith.constant 0 : i32
    %c0_i32_0 = arith.constant 0 : i32
    return %c0_i32, %arg1 : i32, i32
  }
  func.func @transform_3(%arg0: i32, %arg1: i32, %arg2: i32) -> (i32, i32) {
    %c0_i32 = arith.constant 0 : i32
    return %arg0, %arg1 : i32, i32
  }
}

</mosaic_0001>

<llo_original>
// kernel: tpu_custom_call.1
$region0: #{tpu_custom_call.1}
  #allocation0 [shape = 'u32[]', space=smem, size = 0x4, offset = 0x4, fixed_abs, tag = 'smem constant byte address 0x4 - core index']
  #allocation1 [shape = 'u32[144,128]{1,0:T(1,128)}', space=vmem, size = 0x12000, scoped, tag = 'internal scratch']
  #allocation2 [shape = 'f32[16,256]{1,0:T(8,128)}', space=vmem, size = 0x4000, scoped, tag = 'scratch operand']
  %s0 = inlined_call_operand.hbm [shape: f32[16,256], index: 0, kind: input, shape index: {}]
  %s1 = inlined_call_operand.hbm [shape: f32[256,256], index: 1, kind: input, shape index: {}]
  %s2 = inlined_call_operand.vmem [shape: f32[1,256], index: 2, kind: input, shape index: {}]
  %s3 = inlined_call_operand.hbm [shape: f32[16,256], index: 3, kind: output, shape index: {}]
  %s4 = sld [smem:[#allocation0]]
  $region38: #{tpu_custom_call.1} parent=0
    _
  %s6 = ssub.s32 1, %s4
  %s7 = scalar_select 0, %s6, %s4
  $region1: #{tpu_custom_call.1} parent=0
    #allocation3 [shape = 'u8[16384]{0}', space=vmem, size = 0x4000, scoped, tag = 'input window, operand 0, single buffered']
    #allocation4 [shape = 's32[1]{0}', space=sflag, size = 0x4, scoped, tag = 'scoped memory for tpu_custom_call.1']
    #allocation5 [shape = 's32[1]{0}', space=sflag, size = 0x4, scoped, tag = 'scoped memory for tpu_custom_call.1']
    #allocation6 [shape = 'u8[262144]{0}', space=vmem, size = 0x40000, scoped, tag = 'input window, operand 1, single buffered']
    #allocation7 [shape = 's32[1]{0}', space=sflag, size = 0x4, scoped, tag = 'scoped memory for tpu_custom_call.1']
    #allocation8 [shape = 'u8[16384]{0}', space=vmem, size = 0x4000, scoped, tag = 'output window, operand 0, single buffered']
    %8 = vsyncpa [#allocation4], 0
    %9 = vsyncpa [#allocation7], 0
    %10 = vsyncpa [#allocation5], 0
    // Predicated region
    $region2: #{tpu_custom_call.1} parent=1 // pred_check
      _
    $region3: #{tpu_custom_call.1} parent=1 // pred_check_branch
      %12 = sbr.rel (0) target = $region5
    $region4: #{tpu_custom_call.1} parent=1 // pred_region
      %s14 = ssub.s32 512, 512
      %15 = vsyncadd [#allocation4], %s14
      %s16 = sshll.u32 [#allocation3], 4
      %s17 = int_to_ptr.vmem [resolvable:$true] %s16
      %22 = dma.hbm_to_vmem [thread:$0]  %s0, 512, %s17, [#allocation4], 256, 256, 16
    $region5: #{tpu_custom_call.1} parent=1 // pred_fallthru
      _
    // Predicated region
    $region6: #{tpu_custom_call.1} parent=1 // pred_check
      _
    $region7: #{tpu_custom_call.1} parent=1 // pred_check_branch
      %24 = sbr.rel (0) target = $region9
    $region8: #{tpu_custom_call.1} parent=1 // pred_region
      %s26 = ssub.s32 8192, 8192
      %27 = vsyncadd [#allocation7], %s26
      %s28 = sshll.u32 [#allocation6], 4
      %s29 = int_to_ptr.vmem [resolvable:$true] %s28
      %34 = dma.hbm_to_vmem [thread:$0]  %s1, 8192, %s29, [#allocation7], 256, 256, 16
    $region9: #{tpu_custom_call.1} parent=1 // pred_fallthru
      _
    // Predicated region
    $region10: #{tpu_custom_call.1} parent=1 // pred_check
      _
    $region11: #{tpu_custom_call.1} parent=1 // pred_check_branch
      %36 = sbr.rel (0) target = $region13
    $region12: #{tpu_custom_call.1} parent=1 // pred_region
      _
    $region13: #{tpu_custom_call.1} parent=1 // pred_fallthru
      _
    // Predicated region
    $region14: #{tpu_custom_call.1} parent=1 // pred_check
      _
    $region15: #{tpu_custom_call.1} parent=1 // pred_check_branch
      %38 = sbr.rel (0) target = $region17
    $region16: #{tpu_custom_call.1} parent=1 // pred_region
      %39 = dma.done [#allocation4], 512
    $region17: #{tpu_custom_call.1} parent=1 // pred_fallthru
      _
    // Predicated region
    $region18: #{tpu_custom_call.1} parent=1 // pred_check
      _
    $region19: #{tpu_custom_call.1} parent=1 // pred_check_branch
      %41 = sbr.rel (0) target = $region21
    $region20: #{tpu_custom_call.1} parent=1 // pred_region
      %42 = dma.done [#allocation7], 8192
    $region21: #{tpu_custom_call.1} parent=1 // pred_fallthru
      _
    %p43 = scmp.eq.s32.totalorder 0, 0
    // Predicated region
    $region22: #{tpu_custom_call.1} parent=1 // pred_check
      %p44 = pneg %p43
    $region23: #{tpu_custom_call.1} parent=1 // pred_check_branch
      %46 = sbr.rel (%p44) target = $region25
    $region24: #{tpu_custom_call.1} parent=1 // pred_region
      %47 = vst [vmem:[#allocation2] sm:$0xff] 0.0
      %48 = vst [vmem:[#allocation2 + $0x8] sm:$0xff] 0.0
      %49 = vst [vmem:[#allocation2 + $0x10] sm:$0xff] 0.0
      %50 = vst [vmem:[#allocation2 + $0x18] sm:$0xff] 0.0
    $region25: #{tpu_custom_call.1} parent=1 // pred_fallthru
      _
    %v51 = vld [vmem:[#allocation2] sm:$0xff]
    %v52 = vld [vmem:[#allocation2 + $0x8] sm:$0xff]
    %v53 = vld [vmem:[#allocation2 + $0x10] sm:$0xff]
    %v54 = vld [vmem:[#allocation2 + $0x18] sm:$0xff]
    %v55 = vld [vmem:[#allocation3] sm:$0xff]
    %v56 = vld [vmem:[#allocation3 + $0x8] sm:$0xff]
    %v57 = vld [vmem:[#allocation3 + $0x10] sm:$0xff]
    %v58 = vld [vmem:[#allocation3 + $0x18] sm:$0xff]
    %v59 = vld [vmem:[#allocation6] sm:$0xff]
    %v60 = vld [vmem:[#allocation6 + $0x8] sm:$0xff]
    %v61 = vld [vmem:[#allocation6 + $0x10] sm:$0xff]
    %v62 = vld [vmem:[#allocation6 + $0x18] sm:$0xff]
    %v63 = vld [vmem:[#allocation6 + $0x20] sm:$0xff]
    %v64 = vld [vmem:[#allocation6 + $0x28] sm:$0xff]
    %v65 = vld [vmem:[#allocation6 + $0x30] sm:$0xff]
    %v66 = vld [vmem:[#allocation6 + $0x38] sm:$0xff]
    %v67 = vld [vmem:[#allocation6 + $0x40] sm:$0xff]
    %v68 = vld [vmem:[#allocation6 + $0x48] sm:$0xff]
    %v69 = vld [vmem:[#allocation6 + $0x50] sm:$0xff]
    %v70 = vld [vmem:[#allocation6 + $0x58] sm:$0xff]
    %v71 = vld [vmem:[#allocation6 + $0x60] sm:$0xff]
    %v72 = vld [vmem:[#allocation6 + $0x68] sm:$0xff]
    %v73 = vld [vmem:[#allocation6 + $0x70] sm:$0xff]
    %v74 = vld [vmem:[#allocation6 + $0x78] sm:$0xff]
    %v75 = vld [vmem:[#allocation6 + $0x80] sm:$0xff]
    %v76 = vld [vmem:[#allocation6 + $0x88] sm:$0xff]
    %v77 = vld [vmem:[#allocation6 + $0x90] sm:$0xff]
    %v78 = vld [vmem:[#allocation6 + $0x98] sm:$0xff]
    %v79 = vld [vmem:[#allocation6 + $0xa0] sm:$0xff]
    %v80 = vld [vmem:[#allocation6 + $0xa8] sm:$0xff]
    %v81 = vld [vmem:[#allocation6 + $0xb0] sm:$0xff]
    %v82 = vld [vmem:[#allocation6 + $0xb8] sm:$0xff]
    %v83 = vld [vmem:[#allocation6 + $0xc0] sm:$0xff]
    %v84 = vld [vmem:[#allocation6 + $0xc8] sm:$0xff]
    %v85 = vld [vmem:[#allocation6 + $0xd0] sm:$0xff]
    %v86 = vld [vmem:[#allocation6 + $0xd8] sm:$0xff]
    %v87 = vld [vmem:[#allocation6 + $0xe0] sm:$0xff]
    %v88 = vld [vmem:[#allocation6 + $0xe8] sm:$0xff]
    %v89 = vld [vmem:[#allocation6 + $0xf0] sm:$0xff]
    %v90 = vld [vmem:[#allocation6 + $0xf8] sm:$0xff]
    %v91 = vld [vmem:[#allocation6 + $0x100] sm:$0xff]
    %v92 = vld [vmem:[#allocation6 + $0x108] sm:$0xff]
    %v93 = vld [vmem:[#allocation6 + $0x110] sm:$0xff]
    %v94 = vld [vmem:[#allocation6 + $0x118] sm:$0xff]
    %v95 = vld [vmem:[#allocation6 + $0x120] sm:$0xff]
    %v96 = vld [vmem:[#allocation6 + $0x128] sm:$0xff]
    %v97 = vld [vmem:[#allocation6 + $0x130] sm:$0xff]
    %v98 = vld [vmem:[#allocation6 + $0x138] sm:$0xff]
    %v99 = vld [vmem:[#allocation6 + $0x140] sm:$0xff]
    %v100 = vld [vmem:[#allocation6 + $0x148] sm:$0xff]
    %v101 = vld [vmem:[#allocation6 + $0x150] sm:$0xff]
    %v102 = vld [vmem:[#allocation6 + $0x158] sm:$0xff]
    %v103 = vld [vmem:[#allocation6 + $0x160] sm:$0xff]
    %v104 = vld [vmem:[#allocation6 + $0x168] sm:$0xff]
    %v105 = vld [vmem:[#allocation6 + $0x170] sm:$0xff]
    %v106 = vld [vmem:[#allocation6 + $0x178] sm:$0xff]
    %v107 = vld [vmem:[#allocation6 + $0x180] sm:$0xff]
    %v108 = vld [vmem:[#allocation6 + $0x188] sm:$0xff]
    %v109 = vld [vmem:[#allocation6 + $0x190] sm:$0xff]
    %v110 = vld [vmem:[#allocation6 + $0x198] sm:$0xff]
    %v111 = vld [vmem:[#allocation6 + $0x1a0] sm:$0xff]
    %v112 = vld [vmem:[#allocation6 + $0x1a8] sm:$0xff]
    %v113 = vld [vmem:[#allocation6 + $0x1b0] sm:$0xff]
    %v114 = vld [vmem:[#allocation6 + $0x1b8] sm:$0xff]
    %v115 = vld [vmem:[#allocation6 + $0x1c0] sm:$0xff]
    %v116 = vld [vmem:[#allocation6 + $0x1c8] sm:$0xff]
    %v117 = vld [vmem:[#allocation6 + $0x1d0] sm:$0xff]
    %v118 = vld [vmem:[#allocation6 + $0x1d8] sm:$0xff]
    %v119 = vld [vmem:[#allocation6 + $0x1e0] sm:$0xff]
    %v120 = vld [vmem:[#allocation6 + $0x1e8] sm:$0xff]
    %v121 = vld [vmem:[#allocation6 + $0x1f0] sm:$0xff]
    %v122 = vld [vmem:[#allocation6 + $0x1f8] sm:$0xff]
    %123 = vmatprep.subr.mxu0 %v90
    %124 = vmatpush1.msra.mxu0 %v89
    %125 = vmatprep.subr.mxu0 %v88
    %126 = vmatpush1.msra.mxu0 %v87
    %127 = vmatprep.subr.mxu0 %v86
    %128 = vmatpush1.msra.mxu0 %v85
    %129 = vmatprep.subr.mxu0 %v84
    %130 = vmatpush1.msra.mxu0 %v83
    %131 = vmatprep.subr.mxu0 %v82
    %132 = vmatpush1.msra.mxu0 %v81
    %133 = vmatprep.subr.mxu0 %v80
    %134 = vmatpush1.msra.mxu0 %v79
    %135 = vmatprep.subr.mxu0 %v78
    %136 = vmatpush1.msra.mxu0 %v77
    %137 = vmatprep.subr.mxu0 %v76
    %138 = vmatpush1.msra.mxu0 %v75
    %139 = vmatprep.subr.mxu0 %v74
    %140 = vmatpush1.msra.mxu0 %v73
    %141 = vmatprep.subr.mxu0 %v72
    %142 = vmatpush1.msra.mxu0 %v71
    %143 = vmatprep.subr.mxu0 %v70
    %144 = vmatpush1.msra.mxu0 %v69
    %145 = vmatprep.subr.mxu0 %v68
    %146 = vmatpush1.msra.mxu0 %v67
    %147 = vmatprep.subr.mxu0 %v66
    %148 = vmatpush1.msra.mxu0 %v65
    %149 = vmatprep.subr.mxu0 %v64
    %150 = vmatpush1.msra.mxu0 %v63
    %151 = vmatprep.subr.mxu0 %v62
    %152 = vmatpush1.msra.mxu0 %v61
    %153 = vmatprep.subr.mxu0 %v60
    %154 = vmatpush1.msra.mxu0 %v59
    %155 = vmatprep.subr.mxu0 %v122
    %156 = vmatpush2.msra.mxu0 %v121
    %157 = vmatprep.subr.mxu0 %v120
    %158 = vmatpush2.msra.mxu0 %v119
    %159 = vmatprep.subr.mxu0 %v118
    %160 = vmatpush2.msra.mxu0 %v117
    %161 = vmatprep.subr.mxu0 %v116
    %162 = vmatpush2.msra.mxu0 %v115
    %163 = vmatprep.subr.mxu0 %v114
    %164 = vmatpush2.msra.mxu0 %v113
    %165 = vmatprep.subr.mxu0 %v112
    %166 = vmatpush2.msra.mxu0 %v111
    %167 = vmatprep.subr.mxu0 %v110
    %168 = vmatpush2.msra.mxu0 %v109
    %169 = vmatprep.subr.mxu0 %v108
    %170 = vmatpush2.msra.mxu0 %v107
    %171 = vmatprep.subr.mxu0 %v106
    %172 = vmatpush2.msra.mxu0 %v105
    %173 = vmatprep.subr.mxu0 %v104
    %174 = vmatpush2.msra.mxu0 %v103
    %175 = vmatprep.subr.mxu0 %v102
    %176 = vmatpush2.msra.mxu0 %v101
    %177 = vmatprep.subr.mxu0 %v100
    %178 = vmatpush2.msra.mxu0 %v99
    %179 = vmatprep.subr.mxu0 %v98
    %180 = vmatpush2.msra.mxu0 %v97
    %181 = vmatprep.subr.mxu0 %v96
    %182 = vmatpush2.msra.mxu0 %v95
    %183 = vmatprep.subr.mxu0 %v94
    %184 = vmatpush2.msra.mxu0 %v93
    %185 = vmatprep.subr.mxu0 %v92
    %186 = vmatpush2.msra.mxu0 %v91
    %187 = vmatprep.mubr.f32.mxu0 %v56
    %188 = vmatmul.mubr.f32.gmra.mxu0 %v55
    %v189 = vpop.f32.mrf.mxu0
    %v190 = vadd.f32 0.0, %v189
    %v191 = vpop.f32.mrf.mxu0
    %v192 = vadd.f32 0.0, %v191
    %193 = vmatprep.mubr.f32.mxu0 %v58
    %194 = vmatmul.mubr.f32.gmra.mxu0 %v57
    %v195 = vpop.f32.mrf.mxu0
    %v196 = vadd.f32 0.0, %v195
    %v197 = vpop.f32.mrf.mxu0
    %v198 = vadd.f32 0.0, %v197
    %199 = vdwg.mxu0
    %v200 = vadd.f32 %v51, %v190
    %v201 = vadd.f32 %v52, %v192
    %v202 = vadd.f32 %v53, %v196
    %v203 = vadd.f32 %v54, %v198
    %204 = vst [vmem:[#allocation2] sm:$0xff] %v200
    %205 = vst [vmem:[#allocation2 + $0x8] sm:$0xff] %v201
    %206 = vst [vmem:[#allocation2 + $0x10] sm:$0xff] %v202
    %207 = vst [vmem:[#allocation2 + $0x18] sm:$0xff] %v203
    // Predicated region
    $region26: #{tpu_custom_call.1} parent=1 // pred_check
      %p208 = pneg %p43
    $region27: #{tpu_custom_call.1} parent=1 // pred_check_branch
      %210 = sbr.rel (%p208) target = $region29
    $region28: #{tpu_custom_call.1} parent=1 // pred_region
      %v211 = vld [vmem:[#allocation2] sm:$0xff]
      %v212 = vld [vmem:[#allocation2 + $0x8] sm:$0xff]
      %v213 = vld [vmem:[#allocation2 + $0x10] sm:$0xff]
      %v214 = vld [vmem:[#allocation2 + $0x18] sm:$0xff]
      %v215 = vld [vmem:[%s2] sm:$0x3]
      %v217 = vlaneseq
      %v218 = vshrl.u32 %v217, 7
      %v219 = vsub.s32 0, %v218
      %v220 = vrot.slane %v215, %v219
      %v221 = vlaneseq
      %v222 = vshrl.u32 %v221, 7
      %v223 = vsub.s32 1, %v222
      %v224 = vrot.slane %v215, %v223
      %v227 = vadd.f32 %v211, %v220
      %v228 = vadd.f32 %v212, %v224
      %v229 = vadd.f32 %v213, %v220
      %v230 = vadd.f32 %v214, %v224
      %231 = vst [vmem:[#allocation8] sm:$0xff] %v227
      %232 = vst [vmem:[#allocation8 + $0x8] sm:$0xff] %v228
      %233 = vst [vmem:[#allocation8 + $0x10] sm:$0xff] %v229
      %234 = vst [vmem:[#allocation8 + $0x18] sm:$0xff] %v230
    $region29: #{tpu_custom_call.1} parent=1 // pred_fallthru
      _
    // Predicated region
    $region30: #{tpu_custom_call.1} parent=1 // pred_check
      _
    $region31: #{tpu_custom_call.1} parent=1 // pred_check_branch
      %236 = sbr.rel (0) target = $region33
    $region32: #{tpu_custom_call.1} parent=1 // pred_region
      %s238 = ssub.s32 512, 512
      %239 = vsyncadd [#allocation5], %s238
      %s240 = sshll.u32 [#allocation8], 4
      %s241 = int_to_ptr.vmem [resolvable:$true] %s240
      %246 = dma.vmem_to_hbm [thread:$0]  %s241, 512, %s3, [#allocation5], 256, 256, 16
    $region33: #{tpu_custom_call.1} parent=1 // pred_fallthru
      _
    // Predicated region
    $region34: #{tpu_custom_call.1} parent=1 // pred_check
      _
    $region35: #{tpu_custom_call.1} parent=1 // pred_check_branch
      %248 = sbr.rel (0) target = $region37
    $region36: #{tpu_custom_call.1} parent=1 // pred_region
      %249 = dma.done [#allocation5], 512
    $region37: #{tpu_custom_call.1} parent=1 // pred_fallthru
      _
    %250 = vsyncpa [#allocation4], 1
    %251 = vsyncpa [#allocation7], 1
    %252 = vsyncpa [#allocation5], 1

</llo_original>
